<compile_context>
chip_gen: v7x
topology: tpu7x:2x2x1
jax: 0.10.0
libtpu: 0.0.40
codegen_flags: <defaults>
</compile_context>

<pallas_src>
import math

import jax
import jax.numpy as jnp
from jax.experimental import pallas as pl
from jax.experimental.pallas import tpu as pltpu


# ----------------------------------------------------------------------------
# Pallas kernel: full forward pass (node embedding -> 2x GCN -> bond energy ->
# fused transmembrane validator -> total energy), scalars packed in one row.
# ----------------------------------------------------------------------------
def _physics_disc_kernel(
    # graph / geometry
    x_ref, a_ref, ssum_ref, bvec_ref,
    # node embedding
    w_emb_ref, b_emb_ref,
    # GCN layers (linear weight [in,out], separate bias)
    wg1_ref, bg1_ref, wg2_ref, bg2_ref,
    # bond-energy predictor
    wb1_ref, bb1_ref, wb2_ref, bb2_ref,
    # TM validator (both branches fused: concat layer1, block-diag layers 2/3)
    wt1_ref, bt1_ref, wt2_ref, bt2_ref, wt3_ref, bt3_ref,
    # output: [e_bond, tm_score, e_total, 0, ...] in one (1, 128) row
    out_ref,
):
    f32 = jnp.float32
    bf16 = jnp.bfloat16
    relu = lambda v: jnp.maximum(v, 0.0)

    def mxu(v, w_ref):
        # bf16 operands on the MXU, f32 accumulation; activations stay f32.
        return jnp.dot(v.astype(bf16), w_ref[...], preferred_element_type=f32)

    # ---- node embedding: Linear -> ReLU -> Dropout(identity) ----
    h = relu(mxu(x_ref[...], w_emb_ref) + b_emb_ref[...])                 # [N, H]

    # ---- conv1/conv2: GCNConv == A_hat @ (h W) + b, then ReLU ----
    a_hat = a_ref[...]                                                    # [N, N] bf16
    t = mxu(h, wg1_ref)                                                   # [N, 2H]
    h = relu(jnp.dot(a_hat, t.astype(bf16), preferred_element_type=f32) + bg1_ref[...])
    t = mxu(h, wg2_ref)                                                   # [N, 2H]
    h = relu(jnp.dot(a_hat, t.astype(bf16), preferred_element_type=f32) + bg2_ref[...])

    # ---- bond energy ----
    # edge_feat @ Wb1 == (0.5 * S_sum @ h) @ Wb1 == S_sum @ (0.5 * h @ Wb1):
    # project first (N*2H*H), then gather the narrower [N,H] result (E*N*H).
    p = mxu(h, wb1_ref) * 0.5                                             # [N, H]
    eh = relu(jnp.dot(ssum_ref[...], p.astype(bf16),
                      preferred_element_type=f32) + bb1_ref[...])         # [E, H]

    # Reduce over edges BEFORE the final Linear (linearity) using a ones-row
    # MXU dot instead of an XLU cross-sublane reduce, then the tiny f32 head.
    e_cnt = eh.shape[0]
    ones_e = jnp.ones((1, e_cnt), f32)
    eh_red = jnp.dot(ones_e, eh, preferred_element_type=f32)              # [1, H]
    bond_mlp = (jnp.dot(eh_red, wb2_ref[...], preferred_element_type=f32)
                + e_cnt * bb2_ref[...])                                   # [1, 1]

    bv = bvec_ref[...]                                                    # [E, 3] f32
    blen = jnp.sqrt(jnp.sum(bv * bv, axis=1, keepdims=True))              # [E, 1]
    harm_sum = jnp.sum(1000.0 * (blen - 1.5) ** 2)
    e_bond = jnp.sum(bond_mlp) + harm_sum

    # ---- transmembrane validator (hydrophobicity + helix branches fused) ----
    z = relu(mxu(h, wt1_ref) + bt1_ref[...])                              # [N, 2H]
    z = relu(mxu(z, wt2_ref) + bt2_ref[...])                              # [N, H]
    z = jax.nn.sigmoid(jnp.dot(z, wt3_ref[...],
                               preferred_element_type=f32) + bt3_ref[...])  # [N, 2]
    tm_score = jnp.mean(z)     # == (mean(hydrophobicity) + mean(helix)) / 2

    # e_angle = e_dihedral = e_nb = 1.0 (constants in the reference module)
    e_total = e_bond + 3.0
    e_total = e_total + jnp.where(tm_score < 0.5, (1.0 - tm_score) * 10.0, 0.0)

    # single lane-dense output row (one unmasked 128-lane store)
    lane = jax.lax.broadcasted_iota(jnp.int32, (1, 128), 1)
    out_ref[...] = jnp.where(
        lane == 0, e_bond,
        jnp.where(lane == 1, tm_score,
                  jnp.where(lane == 2, e_total, 0.0))).astype(f32)


# ----------------------------------------------------------------------------
# Host-side glue: normalized adjacency, edge select matrix, parameter packing.
# ----------------------------------------------------------------------------
def build_gcn_adjacency(edge_index, num_nodes):
    """A_hat[dst, src] = deg^-1/2[dst] * (A+I)[dst,src] * deg^-1/2[src]."""
    src, dst = edge_index[0], edge_index[1]
    a = jnp.zeros((num_nodes, num_nodes), jnp.float32)
    a = a.at[dst, src].add(1.0)
    a = a + jnp.eye(num_nodes, dtype=jnp.float32)       # self loops
    deg = jnp.sum(a, axis=1)
    dinv = jnp.where(deg > 0, jax.lax.rsqrt(deg), 0.0)
    return a * dinv[:, None] * dinv[None, :]


def _block_diag(a, b):
    za = jnp.zeros((a.shape[0], b.shape[1]), a.dtype)
    zb = jnp.zeros((b.shape[0], a.shape[1]), b.dtype)
    return jnp.concatenate(
        [jnp.concatenate([a, za], axis=1), jnp.concatenate([zb, b], axis=1)],
        axis=0)


def init_params(key, input_dim, hidden_dim):
    H = hidden_dim
    H2 = 2 * hidden_dim
    Hh = hidden_dim // 2

    def lin(k, fan_in, fan_out):
        k1, k2 = jax.random.split(k)
        bound = 1.0 / math.sqrt(fan_in)
        w = jax.random.uniform(k1, (fan_in, fan_out), jnp.float32, -bound, bound)
        b = jax.random.uniform(k2, (1, fan_out), jnp.float32, -bound, bound)
        return w, b

    ks = jax.random.split(key, 11)
    p = {}
    p["w_emb"], p["b_emb"] = lin(ks[0], input_dim, H)
    p["wg1"], p["bg1"] = lin(ks[1], H, H2)          # GCNConv1
    p["wg2"], p["bg2"] = lin(ks[2], H2, H2)         # GCNConv2
    p["wb1"], p["bb1"] = lin(ks[3], H2, H)          # bond energy MLP
    p["wb2"], p["bb2"] = lin(ks[4], H, 1)
    p["wh1"], p["bh1"] = lin(ks[5], H2, H)          # TM hydrophobicity branch
    p["wh2"], p["bh2"] = lin(ks[6], H, Hh)
    p["wh3"], p["bh3"] = lin(ks[7], Hh, 1)
    p["wx1"], p["bx1"] = lin(ks[8], H2, H)          # TM helix branch
    p["wx2"], p["bx2"] = lin(ks[9], H, Hh)
    p["wx3"], p["bx3"] = lin(ks[10], Hh, 1)
    return p


def pack_params(p):
    """Cast MXU weights to bf16 and fuse the two TM branches into 3 matmuls."""
    bf16, f32 = jnp.bfloat16, jnp.float32
    return dict(
        w_emb=p["w_emb"].astype(bf16), b_emb=p["b_emb"].astype(f32),
        wg1=p["wg1"].astype(bf16), bg1=p["bg1"].astype(f32),
        wg2=p["wg2"].astype(bf16), bg2=p["bg2"].astype(f32),
        wb1=p["wb1"].astype(bf16), bb1=p["bb1"].astype(f32),
        wb2=p["wb2"].astype(f32),  bb2=p["bb2"].astype(f32),
        wt1=jnp.concatenate([p["wh1"], p["wx1"]], axis=1).astype(bf16),
        bt1=jnp.concatenate([p["bh1"], p["bx1"]], axis=1).astype(f32),
        wt2=_block_diag(p["wh2"], p["wx2"]).astype(bf16),
        bt2=jnp.concatenate([p["bh2"], p["bx2"]], axis=1).astype(f32),
        wt3=_block_diag(p["wh3"], p["wx3"]).astype(f32),
        bt3=jnp.concatenate([p["bh3"], p["bx3"]], axis=1).astype(f32),
    )


def physics_discriminator_forward(packed, x, edge_index, pos, batch,
                                  is_transmembrane=True):
    # NOTE: reference PyTorch crashes when is_transmembrane=False (None < 0.5),
    # so the only well-defined path uses the TM validator.
    del batch
    num_nodes = x.shape[0]
    src, dst = edge_index[0], edge_index[1]

    a_hat = build_gcn_adjacency(edge_index, num_nodes).astype(jnp.bfloat16)
    # single combined edge-select: S_sum @ h == h[src] + h[dst]
    s_sum = (jax.nn.one_hot(src, num_nodes, dtype=jnp.float32)
             + jax.nn.one_hot(dst, num_nodes, dtype=jnp.float32)).astype(jnp.bfloat16)
    # positions are kernel inputs -> gather them with native XLA (removes the
    # lane-width-3 [E,N]x[N,3] matmul from the kernel entirely)
    bond_vec = (pos[dst] - pos[src]).astype(jnp.float32)

    inputs = (
        x.astype(jnp.bfloat16), a_hat, s_sum, bond_vec,
        packed["w_emb"], packed["b_emb"],
        packed["wg1"], packed["bg1"], packed["wg2"], packed["bg2"],
        packed["wb1"], packed["bb1"], packed["wb2"], packed["bb2"],
        packed["wt1"], packed["bt1"], packed["wt2"], packed["bt2"],
        packed["wt3"], packed["bt3"],
    )

    # advisory cost estimate + explicit VMEM budget (headroom over the I/O set)
    N = int(num_nodes)
    E = int(src.shape[0])
    Din = int(x.shape[1])
    H = int(packed["w_emb"].shape[1])
    H2 = 2 * H
    flops = 2 * (N * Din * H                    # embedding
                 + N * H * H2 + N * N * H2      # conv1
                 + N * H2 * H2 + N * N * H2     # conv2
                 + N * H2 * H + E * N * H       # bond projection + gather
                 + E * H + H                    # edge reduction + head
                 + N * H2 * H2 + N * H2 * H + N * H * 2)   # fused TM validator
    io_bytes = sum(int(a.size) * a.dtype.itemsize for a in inputs) + 128 * 4
    vmem_limit = int(min(64 << 20, max(32 << 20, 4 * io_bytes)))

    vmem = pltpu.MemorySpace.VMEM
    out = pl.pallas_call(
        _physics_disc_kernel,
        out_shape=jax.ShapeDtypeStruct((1, 128), jnp.float32),
        in_specs=[pl.BlockSpec(memory_space=vmem)] * len(inputs),
        out_specs=pl.BlockSpec(memory_space=vmem),
        compiler_params=pltpu.CompilerParams(vmem_limit_bytes=vmem_limit),
        cost_estimate=pl.CostEstimate(flops=flops, transcendentals=2 * N,
                                      bytes_accessed=io_bytes),
    )(*inputs)

    one = jnp.float32(1.0)
    return {
        "bond_energy": out[0, 0],
        "angle_energy": one,
        "dihedral_energy": one,
        "nonbonded_energy": one,
        "total_energy": out[0, 2],
        "tm_score": out[0, 1],
    }


if __name__ == "__main__":
    key = jax.random.PRNGKey(0)
    k_param, k_x, k_pos = jax.random.split(key, 3)

    num_nodes = 16
    input_dim = 16
    hidden_dim = 32

    raw_params = init_params(k_param, input_dim, hidden_dim)
    params = pack_params(raw_params)

    x = jax.random.normal(k_x, (num_nodes, input_dim), jnp.float32)
    pos = jax.random.normal(k_pos, (num_nodes, 3), jnp.float32) * 2.0
    # simple bidirectional chain graph: 0-1-2-...-15
    src = jnp.concatenate(
        [jnp.arange(num_nodes - 1), jnp.arange(1, num_nodes)]).astype(jnp.int32)
    dst = jnp.concatenate(
        [jnp.arange(1, num_nodes), jnp.arange(num_nodes - 1)]).astype(jnp.int32)
    edge_index = jnp.stack([src, dst], axis=0)                    # [2, E]
    batch = jnp.zeros((num_nodes,), jnp.int32)

    out = physics_discriminator_forward(params, x, edge_index, pos, batch,
                                        is_transmembrane=True)
    out = jax.block_until_ready(out)

    assert bool(jnp.isfinite(out["total_energy"]))
    assert bool(jnp.isfinite(out["bond_energy"]))
    assert 0.0 <= float(out["tm_score"]) <= 1.0
    print("KERNEL_OK")
</pallas_src>

<mosaic_0001>
module attributes {stable_mosaic.version = 11 : i64} {
  func.func @_physics_disc_kernel(%arg0: memref<16x16xbf16, #tpu.memory_space<vmem>>, %arg1: memref<16x16xbf16, #tpu.memory_space<vmem>>, %arg2: memref<30x16xbf16, #tpu.memory_space<vmem>>, %arg3: memref<30x3xf32, #tpu.memory_space<vmem>>, %arg4: memref<16x32xbf16, #tpu.memory_space<vmem>>, %arg5: memref<1x32xf32, #tpu.memory_space<vmem>>, %arg6: memref<32x64xbf16, #tpu.memory_space<vmem>>, %arg7: memref<1x64xf32, #tpu.memory_space<vmem>>, %arg8: memref<64x64xbf16, #tpu.memory_space<vmem>>, %arg9: memref<1x64xf32, #tpu.memory_space<vmem>>, %arg10: memref<64x32xbf16, #tpu.memory_space<vmem>>, %arg11: memref<1x32xf32, #tpu.memory_space<vmem>>, %arg12: memref<32x1xf32, #tpu.memory_space<vmem>>, %arg13: memref<1x1xf32, #tpu.memory_space<vmem>>, %arg14: memref<64x64xbf16, #tpu.memory_space<vmem>>, %arg15: memref<1x64xf32, #tpu.memory_space<vmem>>, %arg16: memref<64x32xbf16, #tpu.memory_space<vmem>>, %arg17: memref<1x32xf32, #tpu.memory_space<vmem>>, %arg18: memref<32x2xf32, #tpu.memory_space<vmem>>, %arg19: memref<1x2xf32, #tpu.memory_space<vmem>>, %arg20: memref<1x128xf32, #tpu.memory_space<vmem>>) attributes {dimension_semantics = [], scalar_prefetch = 0 : i64, scratch_operands = 0 : i64, tpu.core_type = #tpu.core_type<tc>} {
    %c0 = arith.constant 0 : index
    %c0_0 = arith.constant 0 : index
    %0 = vector.load %arg0[%c0, %c0_0] : memref<16x16xbf16, #tpu.memory_space<vmem>>, vector<16x16xbf16>
    %c0_1 = arith.constant 0 : index
    %c0_2 = arith.constant 0 : index
    %1 = vector.load %arg4[%c0_1, %c0_2] : memref<16x32xbf16, #tpu.memory_space<vmem>>, vector<16x32xbf16>
    %cst = arith.constant dense<0.000000e+00> : vector<16x32xf32>
    %2 = tpu.matmul %0, %1, %cst {dimension_numbers = #tpu.dot_dimension_numbers<[1], [0], [0], [1], [0, 0, 1, 1], [], []>} : vector<16x16xbf16>, vector<16x32xbf16>, vector<16x32xf32> -> vector<16x32xf32>
    %c0_3 = arith.constant 0 : index
    %c0_4 = arith.constant 0 : index
    %3 = vector.load %arg5[%c0_3, %c0_4] : memref<1x32xf32, #tpu.memory_space<vmem>>, vector<1x32xf32>
    %4 = vector.broadcast %3 : vector<1x32xf32> to vector<16x32xf32>
    %5 = arith.addf %2, %4 : vector<16x32xf32>
    %cst_5 = arith.constant 0.000000e+00 : f32
    %6 = vector.broadcast %cst_5 : f32 to vector<16x32xf32>
    %7 = arith.maximumf %5, %6 : vector<16x32xf32>
    %c0_6 = arith.constant 0 : index
    %c0_7 = arith.constant 0 : index
    %8 = vector.load %arg1[%c0_6, %c0_7] : memref<16x16xbf16, #tpu.memory_space<vmem>>, vector<16x16xbf16>
    %9 = arith.truncf %7 : vector<16x32xf32> to vector<16x32xbf16>
    %c0_8 = arith.constant 0 : index
    %c0_9 = arith.constant 0 : index
    %10 = vector.load %arg6[%c0_8, %c0_9] : memref<32x64xbf16, #tpu.memory_space<vmem>>, vector<32x64xbf16>
    %cst_10 = arith.constant dense<0.000000e+00> : vector<16x64xf32>
    %11 = tpu.matmul %9, %10, %cst_10 {dimension_numbers = #tpu.dot_dimension_numbers<[1], [0], [0], [1], [0, 0, 1, 1], [], []>} : vector<16x32xbf16>, vector<32x64xbf16>, vector<16x64xf32> -> vector<16x64xf32>
    %12 = arith.truncf %11 : vector<16x64xf32> to vector<16x64xbf16>
    %cst_11 = arith.constant dense<0.000000e+00> : vector<16x64xf32>
    %13 = tpu.matmul %8, %12, %cst_11 {dimension_numbers = #tpu.dot_dimension_numbers<[1], [0], [0], [1], [0, 0, 1, 1], [], []>} : vector<16x16xbf16>, vector<16x64xbf16>, vector<16x64xf32> -> vector<16x64xf32>
    %c0_12 = arith.constant 0 : index
    %c0_13 = arith.constant 0 : index
    %14 = vector.load %arg7[%c0_12, %c0_13] : memref<1x64xf32, #tpu.memory_space<vmem>>, vector<1x64xf32>
    %15 = vector.broadcast %14 : vector<1x64xf32> to vector<16x64xf32>
    %16 = arith.addf %13, %15 : vector<16x64xf32>
    %cst_14 = arith.constant 0.000000e+00 : f32
    %17 = vector.broadcast %cst_14 : f32 to vector<16x64xf32>
    %18 = arith.maximumf %16, %17 : vector<16x64xf32>
    %19 = arith.truncf %18 : vector<16x64xf32> to vector<16x64xbf16>
    %c0_15 = arith.constant 0 : index
    %c0_16 = arith.constant 0 : index
    %20 = vector.load %arg8[%c0_15, %c0_16] : memref<64x64xbf16, #tpu.memory_space<vmem>>, vector<64x64xbf16>
    %cst_17 = arith.constant dense<0.000000e+00> : vector<16x64xf32>
    %21 = tpu.matmul %19, %20, %cst_17 {dimension_numbers = #tpu.dot_dimension_numbers<[1], [0], [0], [1], [0, 0, 1, 1], [], []>} : vector<16x64xbf16>, vector<64x64xbf16>, vector<16x64xf32> -> vector<16x64xf32>
    %22 = arith.truncf %21 : vector<16x64xf32> to vector<16x64xbf16>
    %cst_18 = arith.constant dense<0.000000e+00> : vector<16x64xf32>
    %23 = tpu.matmul %8, %22, %cst_18 {dimension_numbers = #tpu.dot_dimension_numbers<[1], [0], [0], [1], [0, 0, 1, 1], [], []>} : vector<16x16xbf16>, vector<16x64xbf16>, vector<16x64xf32> -> vector<16x64xf32>
    %c0_19 = arith.constant 0 : index
    %c0_20 = arith.constant 0 : index
    %24 = vector.load %arg9[%c0_19, %c0_20] : memref<1x64xf32, #tpu.memory_space<vmem>>, vector<1x64xf32>
    %25 = vector.broadcast %24 : vector<1x64xf32> to vector<16x64xf32>
    %26 = arith.addf %23, %25 : vector<16x64xf32>
    %cst_21 = arith.constant 0.000000e+00 : f32
    %27 = vector.broadcast %cst_21 : f32 to vector<16x64xf32>
    %28 = arith.maximumf %26, %27 : vector<16x64xf32>
    %29 = arith.truncf %28 : vector<16x64xf32> to vector<16x64xbf16>
    %c0_22 = arith.constant 0 : index
    %c0_23 = arith.constant 0 : index
    %30 = vector.load %arg10[%c0_22, %c0_23] : memref<64x32xbf16, #tpu.memory_space<vmem>>, vector<64x32xbf16>
    %cst_24 = arith.constant dense<0.000000e+00> : vector<16x32xf32>
    %31 = tpu.matmul %29, %30, %cst_24 {dimension_numbers = #tpu.dot_dimension_numbers<[1], [0], [0], [1], [0, 0, 1, 1], [], []>} : vector<16x64xbf16>, vector<64x32xbf16>, vector<16x32xf32> -> vector<16x32xf32>
    %cst_25 = arith.constant 5.000000e-01 : f32
    %32 = vector.broadcast %cst_25 : f32 to vector<16x32xf32>
    %33 = arith.mulf %31, %32 : vector<16x32xf32>
    %c0_26 = arith.constant 0 : index
    %c0_27 = arith.constant 0 : index
    %34 = vector.load %arg2[%c0_26, %c0_27] : memref<30x16xbf16, #tpu.memory_space<vmem>>, vector<30x16xbf16>
    %35 = arith.truncf %33 : vector<16x32xf32> to vector<16x32xbf16>
    %cst_28 = arith.constant dense<0.000000e+00> : vector<30x32xf32>
    %36 = tpu.matmul %34, %35, %cst_28 {dimension_numbers = #tpu.dot_dimension_numbers<[1], [0], [0], [1], [0, 0, 1, 1], [], []>} : vector<30x16xbf16>, vector<16x32xbf16>, vector<30x32xf32> -> vector<30x32xf32>
    %c0_29 = arith.constant 0 : index
    %c0_30 = arith.constant 0 : index
    %37 = vector.load %arg11[%c0_29, %c0_30] : memref<1x32xf32, #tpu.memory_space<vmem>>, vector<1x32xf32>
    %38 = vector.broadcast %37 : vector<1x32xf32> to vector<30x32xf32>
    %39 = arith.addf %36, %38 : vector<30x32xf32>
    %cst_31 = arith.constant 0.000000e+00 : f32
    %40 = vector.broadcast %cst_31 : f32 to vector<30x32xf32>
    %41 = arith.maximumf %39, %40 : vector<30x32xf32>
    %cst_32 = arith.constant 1.000000e+00 : f32
    %42 = vector.broadcast %cst_32 : f32 to vector<1x30xf32>
    %cst_33 = arith.constant dense<0.000000e+00> : vector<1x32xf32>
    %43 = tpu.matmul %42, %41, %cst_33 {dimension_numbers = #tpu.dot_dimension_numbers<[1], [0], [0], [1], [0, 0, 1, 1], [], []>} : vector<1x30xf32>, vector<30x32xf32>, vector<1x32xf32> -> vector<1x32xf32>
    %c0_34 = arith.constant 0 : index
    %c0_35 = arith.constant 0 : index
    %44 = vector.load %arg12[%c0_34, %c0_35] : memref<32x1xf32, #tpu.memory_space<vmem>>, vector<32x1xf32>
    %cst_36 = arith.constant dense<0.000000e+00> : vector<1x1xf32>
    %45 = tpu.matmul %43, %44, %cst_36 {dimension_numbers = #tpu.dot_dimension_numbers<[1], [0], [0], [1], [0, 0, 1, 1], [], []>} : vector<1x32xf32>, vector<32x1xf32>, vector<1x1xf32> -> vector<1x1xf32>
    %c0_37 = arith.constant 0 : index
    %c0_38 = arith.constant 0 : index
    %46 = vector.load %arg13[%c0_37, %c0_38] : memref<1x1xf32, #tpu.memory_space<vmem>>, vector<1x1xf32>
    %cst_39 = arith.constant 3.000000e+01 : f32
    %47 = vector.broadcast %cst_39 : f32 to vector<1x1xf32>
    %48 = arith.mulf %47, %46 : vector<1x1xf32>
    %49 = arith.addf %45, %48 : vector<1x1xf32>
    %c0_40 = arith.constant 0 : index
    %c0_41 = arith.constant 0 : index
    %50 = vector.load %arg3[%c0_40, %c0_41] : memref<30x3xf32, #tpu.memory_space<vmem>>, vector<30x3xf32>
    %51 = arith.mulf %50, %50 : vector<30x3xf32>
    %cst_42 = arith.constant dense<0.000000e+00> : vector<30xf32>
    %52 = vector.multi_reduction <add>, %51, %cst_42 [1] : vector<30x3xf32> to vector<30xf32>
    %53 = vector.shape_cast %52 : vector<30xf32> to vector<30x1xf32>
    %54 = math.sqrt %53 : vector<30x1xf32>
    %cst_43 = arith.constant 1.500000e+00 : f32
    %55 = vector.broadcast %cst_43 : f32 to vector<30x1xf32>
    %56 = arith.subf %54, %55 : vector<30x1xf32>
    %57 = arith.mulf %56, %56 : vector<30x1xf32>
    %cst_44 = arith.constant 1.000000e+03 : f32
    %58 = vector.broadcast %cst_44 : f32 to vector<30x1xf32>
    %59 = arith.mulf %58, %57 : vector<30x1xf32>
    %60 = vector.shape_cast %59 : vector<30x1xf32> to vector<1x30x1xf32>
    %cst_45 = arith.constant dense<0.000000e+00> : vector<1xf32>
    %61 = vector.multi_reduction <add>, %60, %cst_45 [1, 2] : vector<1x30x1xf32> to vector<1xf32>
    %62 = vector.shape_cast %61 : vector<1xf32> to vector<1x1x1xf32>
    %63 = vector.extract %62[0, 0, 0] : f32 from vector<1x1x1xf32>
    %64 = vector.shape_cast %49 : vector<1x1xf32> to vector<1x1x1xf32>
    %cst_46 = arith.constant dense<0.000000e+00> : vector<1xf32>
    %65 = vector.multi_reduction <add>, %64, %cst_46 [1, 2] : vector<1x1x1xf32> to vector<1xf32>
    %66 = vector.shape_cast %65 : vector<1xf32> to vector<1x1x1xf32>
    %67 = vector.extract %66[0, 0, 0] : f32 from vector<1x1x1xf32>
    %68 = arith.addf %67, %63 : f32
    %69 = arith.truncf %28 : vector<16x64xf32> to vector<16x64xbf16>
    %c0_47 = arith.constant 0 : index
    %c0_48 = arith.constant 0 : index
    %70 = vector.load %arg14[%c0_47, %c0_48] : memref<64x64xbf16, #tpu.memory_space<vmem>>, vector<64x64xbf16>
    %cst_49 = arith.constant dense<0.000000e+00> : vector<16x64xf32>
    %71 = tpu.matmul %69, %70, %cst_49 {dimension_numbers = #tpu.dot_dimension_numbers<[1], [0], [0], [1], [0, 0, 1, 1], [], []>} : vector<16x64xbf16>, vector<64x64xbf16>, vector<16x64xf32> -> vector<16x64xf32>
    %c0_50 = arith.constant 0 : index
    %c0_51 = arith.constant 0 : index
    %72 = vector.load %arg15[%c0_50, %c0_51] : memref<1x64xf32, #tpu.memory_space<vmem>>, vector<1x64xf32>
    %73 = vector.broadcast %72 : vector<1x64xf32> to vector<16x64xf32>
    %74 = arith.addf %71, %73 : vector<16x64xf32>
    %cst_52 = arith.constant 0.000000e+00 : f32
    %75 = vector.broadcast %cst_52 : f32 to vector<16x64xf32>
    %76 = arith.maximumf %74, %75 : vector<16x64xf32>
    %77 = arith.truncf %76 : vector<16x64xf32> to vector<16x64xbf16>
    %c0_53 = arith.constant 0 : index
    %c0_54 = arith.constant 0 : index
    %78 = vector.load %arg16[%c0_53, %c0_54] : memref<64x32xbf16, #tpu.memory_space<vmem>>, vector<64x32xbf16>
    %cst_55 = arith.constant dense<0.000000e+00> : vector<16x32xf32>
    %79 = tpu.matmul %77, %78, %cst_55 {dimension_numbers = #tpu.dot_dimension_numbers<[1], [0], [0], [1], [0, 0, 1, 1], [], []>} : vector<16x64xbf16>, vector<64x32xbf16>, vector<16x32xf32> -> vector<16x32xf32>
    %c0_56 = arith.constant 0 : index
    %c0_57 = arith.constant 0 : index
    %80 = vector.load %arg17[%c0_56, %c0_57] : memref<1x32xf32, #tpu.memory_space<vmem>>, vector<1x32xf32>
    %81 = vector.broadcast %80 : vector<1x32xf32> to vector<16x32xf32>
    %82 = arith.addf %79, %81 : vector<16x32xf32>
    %cst_58 = arith.constant 0.000000e+00 : f32
    %83 = vector.broadcast %cst_58 : f32 to vector<16x32xf32>
    %84 = arith.maximumf %82, %83 : vector<16x32xf32>
    %c0_59 = arith.constant 0 : index
    %c0_60 = arith.constant 0 : index
    %85 = vector.load %arg18[%c0_59, %c0_60] : memref<32x2xf32, #tpu.memory_space<vmem>>, vector<32x2xf32>
    %cst_61 = arith.constant dense<0.000000e+00> : vector<16x2xf32>
    %86 = tpu.matmul %84, %85, %cst_61 {dimension_numbers = #tpu.dot_dimension_numbers<[1], [0], [0], [1], [0, 0, 1, 1], [], []>} : vector<16x32xf32>, vector<32x2xf32>, vector<16x2xf32> -> vector<16x2xf32>
    %c0_62 = arith.constant 0 : index
    %c0_63 = arith.constant 0 : index
    %87 = vector.load %arg19[%c0_62, %c0_63] : memref<1x2xf32, #tpu.memory_space<vmem>>, vector<1x2xf32>
    %88 = vector.broadcast %87 : vector<1x2xf32> to vector<16x2xf32>
    %89 = arith.addf %86, %88 : vector<16x2xf32>
    %90 = arith.negf %89 : vector<16x2xf32>
    %91 = math.exp %90 : vector<16x2xf32>
    %cst_64 = arith.constant 1.000000e+00 : f32
    %92 = vector.broadcast %cst_64 : f32 to vector<16x2xf32>
    %93 = arith.addf %92, %91 : vector<16x2xf32>
    %94 = arith.divf %92, %93 : vector<16x2xf32>
    %95 = vector.shape_cast %94 : vector<16x2xf32> to vector<1x16x2xf32>
    %cst_65 = arith.constant dense<0.000000e+00> : vector<1xf32>
    %96 = vector.multi_reduction <add>, %95, %cst_65 [1, 2] : vector<1x16x2xf32> to vector<1xf32>
    %97 = vector.shape_cast %96 : vector<1xf32> to vector<1x1x1xf32>
    %98 = vector.extract %97[0, 0, 0] : f32 from vector<1x1x1xf32>
    %cst_66 = arith.constant 3.200000e+01 : f32
    %99 = arith.divf %98, %cst_66 : f32
    %cst_67 = arith.constant 3.000000e+00 : f32
    %100 = arith.addf %68, %cst_67 : f32
    %cst_68 = arith.constant 5.000000e-01 : f32
    %101 = arith.cmpf olt, %99, %cst_68 : f32
    %cst_69 = arith.constant 1.000000e+00 : f32
    %102 = arith.subf %cst_69, %99 : f32
    %cst_70 = arith.constant 1.000000e+01 : f32
    %103 = arith.mulf %102, %cst_70 : f32
    %cst_71 = arith.constant 0.000000e+00 : f32
    %104 = arith.select %101, %103, %cst_71 : f32
    %105 = arith.addf %100, %104 : f32
    %106 = tpu.iota {dimensions = array<i32: 1>} : vector<1x128xi32>
    %c0_i32 = arith.constant 0 : i32
    %107 = vector.broadcast %c0_i32 : i32 to vector<1x128xi32>
    %108 = arith.cmpi eq, %106, %107 : vector<1x128xi32>
    %c1_i32 = arith.constant 1 : i32
    %109 = vector.broadcast %c1_i32 : i32 to vector<1x128xi32>
    %110 = arith.cmpi eq, %106, %109 : vector<1x128xi32>
    %c2_i32 = arith.constant 2 : i32
    %111 = vector.broadcast %c2_i32 : i32 to vector<1x128xi32>
    %112 = arith.cmpi eq, %106, %111 : vector<1x128xi32>
    %cst_72 = arith.constant 0.000000e+00 : f32
    %113 = vector.broadcast %105 : f32 to vector<1x128xf32>
    %114 = vector.broadcast %cst_72 : f32 to vector<1x128xf32>
    %115 = arith.select %112, %113, %114 : vector<1x128xi1>, vector<1x128xf32>
    %116 = vector.broadcast %99 : f32 to vector<1x128xf32>
    %117 = arith.select %110, %116, %115 : vector<1x128xi1>, vector<1x128xf32>
    %118 = vector.broadcast %68 : f32 to vector<1x128xf32>
    %119 = arith.select %108, %118, %117 : vector<1x128xi1>, vector<1x128xf32>
    %c0_73 = arith.constant 0 : index
    %c0_74 = arith.constant 0 : index
    %120 = vector.load %arg20[%c0_73, %c0_74] : memref<1x128xf32, #tpu.memory_space<vmem>>, vector<1x128xf32>
    tpu.vector_store %arg20[%c0_73, %c0_74], %119 {strides = array<i32>} : memref<1x128xf32, #tpu.memory_space<vmem>>, vector<1x128xf32>,
    return
  }
}

</mosaic_0001>

<llo_original>
// kernel: tpu_custom_call.1
$region0: #{tpu_custom_call.1}
  #allocation0 [shape = 'u32[]', space=smem, size = 0x4, offset = 0x4, fixed_abs, tag = 'smem constant byte address 0x4 - core index']
  #allocation1 [shape = 'u32[144,128]{1,0:T(1,128)}', space=vmem, size = 0x12000, scoped, tag = 'internal scratch']
  #allocation2 [shape = 'f32[1,1]{1,0:T(1,128)S(1)}', space=vmem, size = 0x200, scoped, tag = 'scoped memory for tpu_custom_call.1']
  %s0 = inlined_call_operand.vmem [shape: bf16[16,16], index: 0, kind: input, shape index: {}]
  %s1 = inlined_call_operand.vmem [shape: bf16[16,16], index: 1, kind: input, shape index: {}]
  %s2 = inlined_call_operand.vmem [shape: bf16[30,16], index: 2, kind: input, shape index: {}]
  %s3 = inlined_call_operand.vmem [shape: f32[30,3], index: 3, kind: input, shape index: {}]
  %s4 = inlined_call_operand.vmem [shape: bf16[16,32], index: 4, kind: input, shape index: {}]
  %s5 = inlined_call_operand.vmem [shape: f32[1,32], index: 5, kind: input, shape index: {}]
  %s6 = inlined_call_operand.vmem [shape: bf16[32,64], index: 6, kind: input, shape index: {}]
  %s7 = inlined_call_operand.vmem [shape: f32[1,64], index: 7, kind: input, shape index: {}]
  %s8 = inlined_call_operand.vmem [shape: bf16[64,64], index: 8, kind: input, shape index: {}]
  %s9 = inlined_call_operand.vmem [shape: f32[1,64], index: 9, kind: input, shape index: {}]
  %s10 = inlined_call_operand.vmem [shape: bf16[64,32], index: 10, kind: input, shape index: {}]
  %s11 = inlined_call_operand.vmem [shape: f32[1,32], index: 11, kind: input, shape index: {}]
  %s12 = inlined_call_operand.vmem [shape: f32[32,1], index: 12, kind: input, shape index: {}]
  %s13 = inlined_call_operand.<no memory space> [shape: f32[1,1], index: 13, kind: input, shape index: {}]
  %s14 = inlined_call_operand.vmem [shape: bf16[64,64], index: 14, kind: input, shape index: {}]
  %s15 = inlined_call_operand.vmem [shape: f32[1,64], index: 15, kind: input, shape index: {}]
  %s16 = inlined_call_operand.vmem [shape: bf16[64,32], index: 16, kind: input, shape index: {}]
  %s17 = inlined_call_operand.vmem [shape: f32[1,32], index: 17, kind: input, shape index: {}]
  %s18 = inlined_call_operand.vmem [shape: f32[32,2], index: 18, kind: input, shape index: {}]
  %s19 = inlined_call_operand.vmem [shape: f32[1,2], index: 19, kind: input, shape index: {}]
  %s20 = inlined_call_operand.hbm [shape: f32[1,128], index: 20, kind: output, shape index: {}]
  %s21 = sld [smem:[#allocation0]]
  $region90: #{tpu_custom_call.1} parent=0
    _
  %s23 = ssub.s32 1, %s21
  %s24 = scalar_select 0, %s23, %s21
  %v25 = vstv %s13
  %26 = vst [vmem:[#allocation2] sm:$0x1] %v25
  $region1: #{tpu_custom_call.1} parent=0
    #allocation3 [shape = 'u8[512]{0}', space=vmem, size = 0x400, scoped, tag = 'output window, operand 0, single buffered']
    #allocation4 [shape = 's32[1]{0}', space=sflag, size = 0x4, scoped, tag = 'scoped memory for tpu_custom_call.1']
    %27 = vsyncpa [#allocation4], 0
    // Predicated region
    $region2: #{tpu_custom_call.1} parent=1 // pred_check
      _
    $region3: #{tpu_custom_call.1} parent=1 // pred_check_branch
      %29 = sbr.rel (0) target = $region5
    $region4: #{tpu_custom_call.1} parent=1 // pred_region
      _
    $region5: #{tpu_custom_call.1} parent=1 // pred_fallthru
      _
    // Predicated region
    $region6: #{tpu_custom_call.1} parent=1 // pred_check
      _
    $region7: #{tpu_custom_call.1} parent=1 // pred_check_branch
      %31 = sbr.rel (0) target = $region9
    $region8: #{tpu_custom_call.1} parent=1 // pred_region
      _
    $region9: #{tpu_custom_call.1} parent=1 // pred_fallthru
      _
    // Predicated region
    $region10: #{tpu_custom_call.1} parent=1 // pred_check
      _
    $region11: #{tpu_custom_call.1} parent=1 // pred_check_branch
      %33 = sbr.rel (0) target = $region13
    $region12: #{tpu_custom_call.1} parent=1 // pred_region
      _
    $region13: #{tpu_custom_call.1} parent=1 // pred_fallthru
      _
    // Predicated region
    $region14: #{tpu_custom_call.1} parent=1 // pred_check
      _
    $region15: #{tpu_custom_call.1} parent=1 // pred_check_branch
      %35 = sbr.rel (0) target = $region17
    $region16: #{tpu_custom_call.1} parent=1 // pred_region
      _
    $region17: #{tpu_custom_call.1} parent=1 // pred_fallthru
      _
    // Predicated region
    $region18: #{tpu_custom_call.1} parent=1 // pred_check
      _
    $region19: #{tpu_custom_call.1} parent=1 // pred_check_branch
      %37 = sbr.rel (0) target = $region21
    $region20: #{tpu_custom_call.1} parent=1 // pred_region
      _
    $region21: #{tpu_custom_call.1} parent=1 // pred_fallthru
      _
    // Predicated region
    $region22: #{tpu_custom_call.1} parent=1 // pred_check
      _
    $region23: #{tpu_custom_call.1} parent=1 // pred_check_branch
      %39 = sbr.rel (0) target = $region25
    $region24: #{tpu_custom_call.1} parent=1 // pred_region
      _
    $region25: #{tpu_custom_call.1} parent=1 // pred_fallthru
      _
    // Predicated region
    $region26: #{tpu_custom_call.1} parent=1 // pred_check
      _
    $region27: #{tpu_custom_call.1} parent=1 // pred_check_branch
      %41 = sbr.rel (0) target = $region29
    $region28: #{tpu_custom_call.1} parent=1 // pred_region
      _
    $region29: #{tpu_custom_call.1} parent=1 // pred_fallthru
      _
    // Predicated region
    $region30: #{tpu_custom_call.1} parent=1 // pred_check
      _
    $region31: #{tpu_custom_call.1} parent=1 // pred_check_branch
      %43 = sbr.rel (0) target = $region33
    $region32: #{tpu_custom_call.1} parent=1 // pred_region
      _
    $region33: #{tpu_custom_call.1} parent=1 // pred_fallthru
      _
    // Predicated region
    $region34: #{tpu_custom_call.1} parent=1 // pred_check
      _
    $region35: #{tpu_custom_call.1} parent=1 // pred_check_branch
      %45 = sbr.rel (0) target = $region37
    $region36: #{tpu_custom_call.1} parent=1 // pred_region
      _
    $region37: #{tpu_custom_call.1} parent=1 // pred_fallthru
      _
    // Predicated region
    $region38: #{tpu_custom_call.1} parent=1 // pred_check
      _
    $region39: #{tpu_custom_call.1} parent=1 // pred_check_branch
      %47 = sbr.rel (0) target = $region41
    $region40: #{tpu_custom_call.1} parent=1 // pred_region
      _
    $region41: #{tpu_custom_call.1} parent=1 // pred_fallthru
      _
    // Predicated region
    $region42: #{tpu_custom_call.1} parent=1 // pred_check
      _
    $region43: #{tpu_custom_call.1} parent=1 // pred_check_branch
      %49 = sbr.rel (0) target = $region45
    $region44: #{tpu_custom_call.1} parent=1 // pred_region
      _
    $region45: #{tpu_custom_call.1} parent=1 // pred_fallthru
      _
    // Predicated region
    $region46: #{tpu_custom_call.1} parent=1 // pred_check
      _
    $region47: #{tpu_custom_call.1} parent=1 // pred_check_branch
      %51 = sbr.rel (0) target = $region49
    $region48: #{tpu_custom_call.1} parent=1 // pred_region
      _
    $region49: #{tpu_custom_call.1} parent=1 // pred_fallthru
      _
    // Predicated region
    $region50: #{tpu_custom_call.1} parent=1 // pred_check
      _
    $region51: #{tpu_custom_call.1} parent=1 // pred_check_branch
      %53 = sbr.rel (0) target = $region53
    $region52: #{tpu_custom_call.1} parent=1 // pred_region
      _
    $region53: #{tpu_custom_call.1} parent=1 // pred_fallthru
      _
    // Predicated region
    $region54: #{tpu_custom_call.1} parent=1 // pred_check
      _
    $region55: #{tpu_custom_call.1} parent=1 // pred_check_branch
      %55 = sbr.rel (0) target = $region57
    $region56: #{tpu_custom_call.1} parent=1 // pred_region
      _
    $region57: #{tpu_custom_call.1} parent=1 // pred_fallthru
      _
    // Predicated region
    $region58: #{tpu_custom_call.1} parent=1 // pred_check
      _
    $region59: #{tpu_custom_call.1} parent=1 // pred_check_branch
      %57 = sbr.rel (0) target = $region61
    $region60: #{tpu_custom_call.1} parent=1 // pred_region
      _
    $region61: #{tpu_custom_call.1} parent=1 // pred_fallthru
      _
    // Predicated region
    $region62: #{tpu_custom_call.1} parent=1 // pred_check
      _
    $region63: #{tpu_custom_call.1} parent=1 // pred_check_branch
      %59 = sbr.rel (0) target = $region65
    $region64: #{tpu_custom_call.1} parent=1 // pred_region
      _
    $region65: #{tpu_custom_call.1} parent=1 // pred_fallthru
      _
    // Predicated region
    $region66: #{tpu_custom_call.1} parent=1 // pred_check
      _
    $region67: #{tpu_custom_call.1} parent=1 // pred_check_branch
      %61 = sbr.rel (0) target = $region69
    $region68: #{tpu_custom_call.1} parent=1 // pred_region
      _
    $region69: #{tpu_custom_call.1} parent=1 // pred_fallthru
      _
    // Predicated region
    $region70: #{tpu_custom_call.1} parent=1 // pred_check
      _
    $region71: #{tpu_custom_call.1} parent=1 // pred_check_branch
      %63 = sbr.rel (0) target = $region73
    $region72: #{tpu_custom_call.1} parent=1 // pred_region
      _
    $region73: #{tpu_custom_call.1} parent=1 // pred_fallthru
      _
    // Predicated region
    $region74: #{tpu_custom_call.1} parent=1 // pred_check
      _
    $region75: #{tpu_custom_call.1} parent=1 // pred_check_branch
      %65 = sbr.rel (0) target = $region77
    $region76: #{tpu_custom_call.1} parent=1 // pred_region
      _
    $region77: #{tpu_custom_call.1} parent=1 // pred_fallthru
      _
    // Predicated region
    $region78: #{tpu_custom_call.1} parent=1 // pred_check
      _
    $region79: #{tpu_custom_call.1} parent=1 // pred_check_branch
      %67 = sbr.rel (0) target = $region81
    $region80: #{tpu_custom_call.1} parent=1 // pred_region
      _
    $region81: #{tpu_custom_call.1} parent=1 // pred_fallthru
      _
    %v69 = vld [vmem:[%s0] sm:$0xf]
    %v70 = vld [vmem:[%s0 + $0x4] sm:$0xf]
    %v71 = vld [vmem:[%s4] sm:$0xf]
    %v72 = vld [vmem:[%s4 + $0x4] sm:$0xf]
    %v73 = vld [vmem:[%s5] sm:$0x1]
    %v75 = vlaneseq
    %v76 = vshrl.u32 %v75, 7
    %v77 = vsub.s32 0, %v76
    %v78 = vrot.slane %v73, %v77
    %v82 = vunpack.c.l.b16 %v69
    %v83 = vunpack.c.l.b16 %v70
    %v84 = vpack.c.b16 %v83, %v82
    %v87 = vunpack.c.l.b16 %v71
    %v88 = vunpack.c.l.b16 %v72
    %v89 = vpack.c.b16 %v88, %v87
    %vm91 = vcmask 130048
    %v93 = vsel %vm91, %v84, 0
    %95 = vmatprep.subr.bf16.mxu0 0
    %96 = vmatpush1.bf16.msra.mxu0 %v89
    %97 = vmatprep.subr.bf16.mxu0 0
    %98 = vmatpush1.bf16.msra.mxu0 0
    %99 = vmatprep.subr.bf16.mxu0 0
    %100 = vmatpush1.bf16.msra.mxu0 0
    %101 = vmatprep.subr.bf16.mxu0 0
    %102 = vmatpush1.bf16.msra.mxu0 0
    %103 = vmatprep.subr.bf16.mxu0 0
    %104 = vmatpush1.bf16.msra.mxu0 0
    %105 = vmatprep.subr.bf16.mxu0 0
    %106 = vmatpush1.bf16.msra.mxu0 0
    %107 = vmatprep.subr.bf16.mxu0 0
    %108 = vmatpush1.bf16.msra.mxu0 0
    %109 = vmatprep.subr.bf16.mxu0 0
    %110 = vmatpush1.bf16.msra.mxu0 0
    %111 = vmatprep.subr.bf16.mxu0 0
    %112 = vmatpush1.bf16.msra.mxu0 0
    %113 = vmatprep.subr.bf16.mxu0 0
    %114 = vmatpush1.bf16.msra.mxu0 0
    %115 = vmatprep.subr.bf16.mxu0 0
    %116 = vmatpush1.bf16.msra.mxu0 0
    %117 = vmatprep.subr.bf16.mxu0 0
    %118 = vmatpush1.bf16.msra.mxu0 0
    %119 = vmatprep.subr.bf16.mxu0 0
    %120 = vmatpush1.bf16.msra.mxu0 0
    %121 = vmatprep.subr.bf16.mxu0 0
    %122 = vmatpush1.bf16.msra.mxu0 0
    %123 = vmatprep.subr.bf16.mxu0 0
    %124 = vmatpush1.bf16.msra.mxu0 0
    %125 = vmatprep.subr.bf16.mxu0 0
    %126 = vmatpush1.bf16.msra.mxu0 0
    %127 = vmatprep.mubr.bf16.mxu0 0
    %128 = vmatmul.mubr.bf16.gmra.mrb[0].mxu0 %v93
    %v129 = vpop.f32.mrb[0].mxu0
    %v130 = vadd.f32 %v78, %v129
    %v131 = vpop.f32.mrb[0].mxu0
    %v132 = vpop.f32.mrb[0].mxu0
    %v133 = vadd.f32 %v78, %v132
    %v134 = vpop.f32.mrb[0].mxu0
    %135 = vdwg.mxu0
    %v136 = vmax.f32 %v130, 0.0
    %v137 = vmax.f32 %v133, 0.0
    %v138 = vld [vmem:[%s1] sm:$0xf]
    %v139 = vld [vmem:[%s1 + $0x4] sm:$0xf]
    %v140 = vpack.c.bf16 %v137, %v136
    %v141 = vld [vmem:[%s6] sm:$0xf]
    %v142 = vld [vmem:[%s6 + $0x4] sm:$0xf]
    %v143 = vld [vmem:[%s6 + $0x8] sm:$0xf]
    %v144 = vld [vmem:[%s6 + $0xc] sm:$0xf]
    %v149 = vunpack.c.l.b16 %v141
    %v150 = vunpack.c.l.b16 %v142
    %v151 = vunpack.c.l.b16 %v143
    %v152 = vunpack.c.l.b16 %v144
    %v153 = vpack.c.b16 %v150, %v149
    %v154 = vpack.c.b16 %v152, %v151
    %vm157 = vcmask 261120
    %v159 = vsel %vm157, %v140, 0
    %161 = vmatprep.subr.bf16.mxu0 0
    %162 = vmatpush1.bf16.msra.mxu0 %v153
    %163 = vmatprep.subr.bf16.mxu0 0
    %164 = vmatpush1.bf16.msra.mxu0 %v154
    %165 = vmatprep.subr.bf16.mxu0 0
    %166 = vmatpush1.bf16.msra.mxu0 0
    %167 = vmatprep.subr.bf16.mxu0 0
    %168 = vmatpush1.bf16.msra.mxu0 0
    %169 = vmatprep.subr.bf16.mxu0 0
    %170 = vmatpush1.bf16.msra.mxu0 0
    %171 = vmatprep.subr.bf16.mxu0 0
    %172 = vmatpush1.bf16.msra.mxu0 0
    %173 = vmatprep.subr.bf16.mxu0 0
    %174 = vmatpush1.bf16.msra.mxu0 0
    %175 = vmatprep.subr.bf16.mxu0 0
    %176 = vmatpush1.bf16.msra.mxu0 0
    %177 = vmatprep.subr.bf16.mxu0 0
    %178 = vmatpush1.bf16.msra.mxu0 0
    %179 = vmatprep.subr.bf16.mxu0 0
    %180 = vmatpush1.bf16.msra.mxu0 0
    %181 = vmatprep.subr.bf16.mxu0 0
    %182 = vmatpush1.bf16.msra.mxu0 0
    %183 = vmatprep.subr.bf16.mxu0 0
    %184 = vmatpush1.bf16.msra.mxu0 0
    %185 = vmatprep.subr.bf16.mxu0 0
    %186 = vmatpush1.bf16.msra.mxu0 0
    %187 = vmatprep.subr.bf16.mxu0 0
    %188 = vmatpush1.bf16.msra.mxu0 0
    %189 = vmatprep.subr.bf16.mxu0 0
    %190 = vmatpush1.bf16.msra.mxu0 0
    %191 = vmatprep.subr.bf16.mxu0 0
    %192 = vmatpush1.bf16.msra.mxu0 0
    %193 = vmatprep.mubr.bf16.mxu0 0
    %194 = vmatmul.mubr.bf16.gmra.mrb[0].mxu0 %v159
    %v195 = vpop.f32.mrb[0].mxu0
    %v196 = vadd.f32 0.0, %v195
    %v197 = vpop.f32.mrb[0].mxu0
    %v198 = vpop.f32.mrb[0].mxu0
    %v199 = vadd.f32 0.0, %v198
    %v200 = vpop.f32.mrb[0].mxu0
    %201 = vdwg.mxu0
    %v202 = vpack.c.bf16 %v199, %v196
    %v203 = vld [vmem:[%s7] sm:$0x1]
    %v205 = vlaneseq
    %v206 = vshrl.u32 %v205, 7
    %v207 = vsub.s32 0, %v206
    %v208 = vrot.slane %v203, %v207
    %v212 = vunpack.c.l.b16 %v138
    %v213 = vunpack.c.l.b16 %v139
    %v214 = vpack.c.b16 %v213, %v212
    %v216 = vsel %vm91, %v214, 0
    %218 = vmatprep.subr.bf16.mxu0 0
    %219 = vmatpush1.bf16.msra.mxu0 %v202
    %220 = vmatprep.subr.bf16.mxu0 0
    %221 = vmatpush1.bf16.msra.mxu0 0
    %222 = vmatprep.subr.bf16.mxu0 0
    %223 = vmatpush1.bf16.msra.mxu0 0
    %224 = vmatprep.subr.bf16.mxu0 0
    %225 = vmatpush1.bf16.msra.mxu0 0
    %226 = vmatprep.subr.bf16.mxu0 0
    %227 = vmatpush1.bf16.msra.mxu0 0
    %228 = vmatprep.subr.bf16.mxu0 0
    %229 = vmatpush1.bf16.msra.mxu0 0
    %230 = vmatprep.subr.bf16.mxu0 0
    %231 = vmatpush1.bf16.msra.mxu0 0
    %232 = vmatprep.subr.bf16.mxu0 0
    %233 = vmatpush1.bf16.msra.mxu0 0
    %234 = vmatprep.subr.bf16.mxu0 0
    %235 = vmatpush1.bf16.msra.mxu0 0
    %236 = vmatprep.subr.bf16.mxu0 0
    %237 = vmatpush1.bf16.msra.mxu0 0
    %238 = vmatprep.subr.bf16.mxu0 0
    %239 = vmatpush1.bf16.msra.mxu0 0
    %240 = vmatprep.subr.bf16.mxu0 0
    %241 = vmatpush1.bf16.msra.mxu0 0
    %242 = vmatprep.subr.bf16.mxu0 0
    %243 = vmatpush1.bf16.msra.mxu0 0
    %244 = vmatprep.subr.bf16.mxu0 0
    %245 = vmatpush1.bf16.msra.mxu0 0
    %246 = vmatprep.subr.bf16.mxu0 0
    %247 = vmatpush1.bf16.msra.mxu0 0
    %248 = vmatprep.subr.bf16.mxu0 0
    %249 = vmatpush1.bf16.msra.mxu0 0
    %250 = vmatprep.mubr.bf16.mxu0 0
    %251 = vmatmul.mubr.bf16.gmra.mrb[0].mxu0 %v216
    %v252 = vpop.f32.mrb[0].mxu0
    %v253 = vadd.f32 %v208, %v252
    %v254 = vpop.f32.mrb[0].mxu0
    %v255 = vpop.f32.mrb[0].mxu0
    %v256 = vadd.f32 %v208, %v255
    %v257 = vpop.f32.mrb[0].mxu0
    %258 = vdwg.mxu0
    %v259 = vmax.f32 %v253, 0.0
    %v260 = vmax.f32 %v256, 0.0
    %v261 = vpack.c.bf16 %v260, %v259
    %v262 = vld [vmem:[%s8] sm:$0xf]
    %v263 = vld [vmem:[%s8 + $0x4] sm:$0xf]
    %v264 = vld [vmem:[%s8 + $0x8] sm:$0xf]
    %v265 = vld [vmem:[%s8 + $0xc] sm:$0xf]
    %v266 = vld [vmem:[%s8 + $0x10] sm:$0xf]
    %v267 = vld [vmem:[%s8 + $0x14] sm:$0xf]
    %v268 = vld [vmem:[%s8 + $0x18] sm:$0xf]
    %v269 = vld [vmem:[%s8 + $0x1c] sm:$0xf]
    %v278 = vunpack.c.l.b16 %v262
    %v279 = vunpack.c.l.b16 %v263
    %v280 = vunpack.c.l.b16 %v264
    %v281 = vunpack.c.l.b16 %v265
    %v282 = vunpack.c.l.b16 %v266
    %v283 = vunpack.c.l.b16 %v267
    %v284 = vunpack.c.l.b16 %v268
    %v285 = vunpack.c.l.b16 %v269
    %v286 = vpack.c.b16 %v279, %v278
    %v287 = vpack.c.b16 %v281, %v280
    %v288 = vpack.c.b16 %v283, %v282
    %v289 = vpack.c.b16 %v285, %v284
    %vm294 = vcmask 523264
    %v296 = vsel %vm294, %v261, 0
    %298 = vmatprep.subr.bf16.mxu0 0
    %299 = vmatpush1.bf16.msra.mxu0 %v286
    %300 = vmatprep.subr.bf16.mxu0 0
    %301 = vmatpush1.bf16.msra.mxu0 %v287
    %302 = vmatprep.subr.bf16.mxu0 0
    %303 = vmatpush1.bf16.msra.mxu0 %v288
    %304 = vmatprep.subr.bf16.mxu0 0
    %305 = vmatpush1.bf16.msra.mxu0 %v289
    %306 = vmatprep.subr.bf16.mxu0 0
    %307 = vmatpush1.bf16.msra.mxu0 0
    %308 = vmatprep.subr.bf16.mxu0 0
    %309 = vmatpush1.bf16.msra.mxu0 0
    %310 = vmatprep.subr.bf16.mxu0 0
    %311 = vmatpush1.bf16.msra.mxu0 0
    %312 = vmatprep.subr.bf16.mxu0 0
    %313 = vmatpush1.bf16.msra.mxu0 0
    %314 = vmatprep.subr.bf16.mxu0 0
    %315 = vmatpush1.bf16.msra.mxu0 0
    %316 = vmatprep.subr.bf16.mxu0 0
    %317 = vmatpush1.bf16.msra.mxu0 0
    %318 = vmatprep.subr.bf16.mxu0 0
    %319 = vmatpush1.bf16.msra.mxu0 0
    %320 = vmatprep.subr.bf16.mxu0 0
    %321 = vmatpush1.bf16.msra.mxu0 0
    %322 = vmatprep.subr.bf16.mxu0 0
    %323 = vmatpush1.bf16.msra.mxu0 0
    %324 = vmatprep.subr.bf16.mxu0 0
    %325 = vmatpush1.bf16.msra.mxu0 0
    %326 = vmatprep.subr.bf16.mxu0 0
    %327 = vmatpush1.bf16.msra.mxu0 0
    %328 = vmatprep.subr.bf16.mxu0 0
    %329 = vmatpush1.bf16.msra.mxu0 0
    %330 = vmatprep.mubr.bf16.mxu0 0
    %331 = vmatmul.mubr.bf16.gmra.mrb[0].mxu0 %v296
    %v332 = vpop.f32.mrb[0].mxu0
    %v333 = vadd.f32 0.0, %v332
    %v334 = vpop.f32.mrb[0].mxu0
    %v335 = vpop.f32.mrb[0].mxu0
    %v336 = vadd.f32 0.0, %v335
    %v337 = vpop.f32.mrb[0].mxu0
    %338 = vdwg.mxu0
    %v339 = vpack.c.bf16 %v336, %v333
    %v340 = vld [vmem:[%s9] sm:$0x1]
    %v342 = vlaneseq
    %v343 = vshrl.u32 %v342, 7
    %v344 = vsub.s32 0, %v343
    %v345 = vrot.slane %v340, %v344
    %347 = vmatprep.subr.bf16.mxu0 0
    %348 = vmatpush1.bf16.msra.mxu0 %v339
    %349 = vmatprep.subr.bf16.mxu0 0
    %350 = vmatpush1.bf16.msra.mxu0 0
    %351 = vmatprep.subr.bf16.mxu0 0
    %352 = vmatpush1.bf16.msra.mxu0 0
    %353 = vmatprep.subr.bf16.mxu0 0
    %354 = vmatpush1.bf16.msra.mxu0 0
    %355 = vmatprep.subr.bf16.mxu0 0
    %356 = vmatpush1.bf16.msra.mxu0 0
    %357 = vmatprep.subr.bf16.mxu0 0
    %358 = vmatpush1.bf16.msra.mxu0 0
    %359 = vmatprep.subr.bf16.mxu0 0
    %360 = vmatpush1.bf16.msra.mxu0 0
    %361 = vmatprep.subr.bf16.mxu0 0
    %362 = vmatpush1.bf16.msra.mxu0 0
    %363 = vmatprep.subr.bf16.mxu0 0
    %364 = vmatpush1.bf16.msra.mxu0 0
    %365 = vmatprep.subr.bf16.mxu0 0
    %366 = vmatpush1.bf16.msra.mxu0 0
    %367 = vmatprep.subr.bf16.mxu0 0
    %368 = vmatpush1.bf16.msra.mxu0 0
    %369 = vmatprep.subr.bf16.mxu0 0
    %370 = vmatpush1.bf16.msra.mxu0 0
    %371 = vmatprep.subr.bf16.mxu0 0
    %372 = vmatpush1.bf16.msra.mxu0 0
    %373 = vmatprep.subr.bf16.mxu0 0
    %374 = vmatpush1.bf16.msra.mxu0 0
    %375 = vmatprep.subr.bf16.mxu0 0
    %376 = vmatpush1.bf16.msra.mxu0 0
    %377 = vmatprep.subr.bf16.mxu0 0
    %378 = vmatpush1.bf16.msra.mxu0 0
    %379 = vmatprep.mubr.bf16.mxu0 0
    %380 = vmatmul.mubr.bf16.gmra.mrb[0].mxu0 %v216
    %v381 = vpop.f32.mrb[0].mxu0
    %v382 = vadd.f32 %v345, %v381
    %v383 = vpop.f32.mrb[0].mxu0
    %v384 = vpop.f32.mrb[0].mxu0
    %v385 = vadd.f32 %v345, %v384
    %v386 = vpop.f32.mrb[0].mxu0
    %387 = vdwg.mxu0
    %v388 = vmax.f32 %v382, 0.0
    %v389 = vmax.f32 %v385, 0.0
    %v390 = vpack.c.bf16 %v389, %v388
    %v391 = vld [vmem:[%s10] sm:$0xf]
    %v392 = vld [vmem:[%s10 + $0x4] sm:$0xf]
    %v393 = vld [vmem:[%s10 + $0x8] sm:$0xf]
    %v394 = vld [vmem:[%s10 + $0xc] sm:$0xf]
    %v395 = vld [vmem:[%s10 + $0x10] sm:$0xf]
    %v396 = vld [vmem:[%s10 + $0x14] sm:$0xf]
    %v397 = vld [vmem:[%s10 + $0x18] sm:$0xf]
    %v398 = vld [vmem:[%s10 + $0x1c] sm:$0xf]
    %v407 = vunpack.c.l.b16 %v391
    %v408 = vunpack.c.l.b16 %v392
    %v409 = vunpack.c.l.b16 %v393
    %v410 = vunpack.c.l.b16 %v394
    %v411 = vunpack.c.l.b16 %v395
    %v412 = vunpack.c.l.b16 %v396
    %v413 = vunpack.c.l.b16 %v397
    %v414 = vunpack.c.l.b16 %v398
    %v415 = vpack.c.b16 %v408, %v407
    %v416 = vpack.c.b16 %v410, %v409
    %v417 = vpack.c.b16 %v412, %v411
    %v418 = vpack.c.b16 %v414, %v413
    %v424 = vsel %vm294, %v390, 0
    %426 = vmatprep.subr.bf16.mxu0 0
    %427 = vmatpush1.bf16.msra.mxu0 %v415
    %428 = vmatprep.subr.bf16.mxu0 0
    %429 = vmatpush1.bf16.msra.mxu0 %v416
    %430 = vmatprep.subr.bf16.mxu0 0
    %431 = vmatpush1.bf16.msra.mxu0 %v417
    %432 = vmatprep.subr.bf16.mxu0 0
    %433 = vmatpush1.bf16.msra.mxu0 %v418
    %434 = vmatprep.subr.bf16.mxu0 0
    %435 = vmatpush1.bf16.msra.mxu0 0
    %436 = vmatprep.subr.bf16.mxu0 0
    %437 = vmatpush1.bf16.msra.mxu0 0
    %438 = vmatprep.subr.bf16.mxu0 0
    %439 = vmatpush1.bf16.msra.mxu0 0
    %440 = vmatprep.subr.bf16.mxu0 0
    %441 = vmatpush1.bf16.msra.mxu0 0
    %442 = vmatprep.subr.bf16.mxu0 0
    %443 = vmatpush1.bf16.msra.mxu0 0
    %444 = vmatprep.subr.bf16.mxu0 0
    %445 = vmatpush1.bf16.msra.mxu0 0
    %446 = vmatprep.subr.bf16.mxu0 0
    %447 = vmatpush1.bf16.msra.mxu0 0
    %448 = vmatprep.subr.bf16.mxu0 0
    %449 = vmatpush1.bf16.msra.mxu0 0
    %450 = vmatprep.subr.bf16.mxu0 0
    %451 = vmatpush1.bf16.msra.mxu0 0
    %452 = vmatprep.subr.bf16.mxu0 0
    %453 = vmatpush1.bf16.msra.mxu0 0
    %454 = vmatprep.subr.bf16.mxu0 0
    %455 = vmatpush1.bf16.msra.mxu0 0
    %456 = vmatprep.subr.bf16.mxu0 0
    %457 = vmatpush1.bf16.msra.mxu0 0
    %458 = vmatprep.mubr.bf16.mxu0 0
    %459 = vmatmul.mubr.bf16.gmra.mrb[0].mxu0 %v424
    %v460 = vpop.f32.mrb[0].mxu0
    %v461 = vadd.f32 0.0, %v460
    %v462 = vpop.f32.mrb[0].mxu0
    %v463 = vpop.f32.mrb[0].mxu0
    %v464 = vadd.f32 0.0, %v463
    %v465 = vpop.f32.mrb[0].mxu0
    %466 = vdwg.mxu0
    %v467 = vmul.f32 %v461, 0.5
    %v468 = vmul.f32 %v464, 0.5
    %v469 = vld [vmem:[%s2] sm:$0xf]
    %v470 = vld [vmem:[%s2 + $0x4] sm:$0xf]
    %v471 = vld [vmem:[%s2 + $0x8] sm:$0xf]
    %v472 = vld [vmem:[%s2 + $0xc] sm:$0x7]
    %v473 = vpack.c.bf16 %v468, %v467
    %v474 = vld [vmem:[%s11] sm:$0x1]
    %v476 = vlaneseq
    %v477 = vshrl.u32 %v476, 7
    %v478 = vsub.s32 0, %v477
    %v479 = vrot.slane %v474, %v478
    %v485 = vunpack.c.l.b16 %v469
    %v486 = vunpack.c.l.b16 %v470
    %v487 = vunpack.c.l.b16 %v471
    %v488 = vunpack.c.l.b16 %v472
    %v489 = vpack.c.b16 %v486, %v485
    %v490 = vpack.c.b16 %v488, %v487
    %v492 = vsel %vm91, %v489, 0
    %v495 = vsel %vm91, %v490, 0
    %497 = vmatprep.subr.bf16.mxu0 0
    %498 = vmatpush1.bf16.msra.mxu0 %v473
    %499 = vmatprep.subr.bf16.mxu0 0
    %500 = vmatpush1.bf16.msra.mxu0 0
    %501 = vmatprep.subr.bf16.mxu0 0
    %502 = vmatpush1.bf16.msra.mxu0 0
    %503 = vmatprep.subr.bf16.mxu0 0
    %504 = vmatpush1.bf16.msra.mxu0 0
    %505 = vmatprep.subr.bf16.mxu0 0
    %506 = vmatpush1.bf16.msra.mxu0 0
    %507 = vmatprep.subr.bf16.mxu0 0
    %508 = vmatpush1.bf16.msra.mxu0 0
    %509 = vmatprep.subr.bf16.mxu0 0
    %510 = vmatpush1.bf16.msra.mxu0 0
    %511 = vmatprep.subr.bf16.mxu0 0
    %512 = vmatpush1.bf16.msra.mxu0 0
    %513 = vmatprep.subr.bf16.mxu0 0
    %514 = vmatpush1.bf16.msra.mxu0 0
    %515 = vmatprep.subr.bf16.mxu0 0
    %516 = vmatpush1.bf16.msra.mxu0 0
    %517 = vmatprep.subr.bf16.mxu0 0
    %518 = vmatpush1.bf16.msra.mxu0 0
    %519 = vmatprep.subr.bf16.mxu0 0
    %520 = vmatpush1.bf16.msra.mxu0 0
    %521 = vmatprep.subr.bf16.mxu0 0
    %522 = vmatpush1.bf16.msra.mxu0 0
    %523 = vmatprep.subr.bf16.mxu0 0
    %524 = vmatpush1.bf16.msra.mxu0 0
    %525 = vmatprep.subr.bf16.mxu0 0
    %526 = vmatpush1.bf16.msra.mxu0 0
    %527 = vmatprep.subr.bf16.mxu0 0
    %528 = vmatpush1.bf16.msra.mxu0 0
    %529 = vmatprep.mubr.bf16.mxu0 0
    %530 = vmatmul.mubr.bf16.gmra.mrb[0].mxu0 %v492
    %v531 = vpop.f32.mrb[0].mxu0
    %v532 = vadd.f32 %v479, %v531
    %v533 = vpop.f32.mrb[0].mxu0
    %v534 = vpop.f32.mrb[0].mxu0
    %v535 = vadd.f32 %v479, %v534
    %v536 = vpop.f32.mrb[0].mxu0
    %537 = vmatprep.mubr.bf16.mxu0 0
    %538 = vmatmul.mubr.bf16.gmra.mrb[0].mxu0 %v495
    %v539 = vpop.f32.mrb[0].mxu0
    %v540 = vadd.f32 %v479, %v539
    %v541 = vpop.f32.mrb[0].mxu0
    %v542 = vpop.f32.mrb[0].mxu0
    %v543 = vadd.f32 %v479, %v542
    %v544 = vpop.f32.mrb[0].mxu0
    %545 = vdwg.mxu0
    %v546 = vmax.f32 %v532, 0.0
    %v547 = vmax.f32 %v535, 0.0
    %v548 = vmax.f32 %v540, 0.0
    %v549 = vmax.f32 %v543, 0.0
    %vm550 = vcmask 244736
    %v552 = vsel %vm550, 1.0, 0
    %vm554 = vcmask 1045504
    %v556 = vsel %vm554, %v549, 0
    %558 = vmatprep.subr.mxu0 0.0
    %559 = vmatpush1.msra.mxu0 %v546
    %560 = vmatprep.subr.mxu0 0.0
    %561 = vmatpush1.msra.mxu0 %v547
    %562 = vmatprep.subr.mxu0 0.0
    %563 = vmatpush1.msra.mxu0 %v548
    %564 = vmatprep.subr.mxu0 0.0
    %565 = vmatpush1.msra.mxu0 %v556
    %566 = vmatprep.subr.mxu0 0.0
    %567 = vmatpush1.msra.mxu0 0.0
    %568 = vmatprep.subr.mxu0 0.0
    %569 = vmatpush1.msra.mxu0 0.0
    %570 = vmatprep.subr.mxu0 0.0
    %571 = vmatpush1.msra.mxu0 0.0
    %572 = vmatprep.subr.mxu0 0.0
    %573 = vmatpush1.msra.mxu0 0.0
    %574 = vmatprep.subr.mxu0 0.0
    %575 = vmatpush1.msra.mxu0 0.0
    %576 = vmatprep.subr.mxu0 0.0
    %577 = vmatpush1.msra.mxu0 0.0
    %578 = vmatprep.subr.mxu0 0.0
    %579 = vmatpush1.msra.mxu0 0.0
    %580 = vmatprep.subr.mxu0 0.0
    %581 = vmatpush1.msra.mxu0 0.0
    %582 = vmatprep.subr.mxu0 0.0
    %583 = vmatpush1.msra.mxu0 0.0
    %584 = vmatprep.subr.mxu0 0.0
    %585 = vmatpush1.msra.mxu0 0.0
    %586 = vmatprep.subr.mxu0 0.0
    %587 = vmatpush1.msra.mxu0 0.0
    %588 = vmatprep.subr.mxu0 0.0
    %589 = vmatpush1.msra.mxu0 0.0
    %590 = vmatprep.subr.mxu0 0.0
    %591 = vmatpush1.msra.mxu0 0.0
    %592 = vmatprep.subr.mxu0 0.0
    %593 = vmatpush1.msra.mxu0 0.0
    %594 = vmatprep.subr.mxu0 0.0
    %595 = vmatpush1.msra.mxu0 0.0
    %596 = vmatprep.subr.mxu0 0.0
    %597 = vmatpush1.msra.mxu0 0.0
    %598 = vmatprep.subr.mxu0 0.0
    %599 = vmatpush1.msra.mxu0 0.0
    %600 = vmatprep.subr.mxu0 0.0
    %601 = vmatpush1.msra.mxu0 0.0
    %602 = vmatprep.subr.mxu0 0.0
    %603 = vmatpush1.msra.mxu0 0.0
    %604 = vmatprep.subr.mxu0 0.0
    %605 = vmatpush1.msra.mxu0 0.0
    %606 = vmatprep.subr.mxu0 0.0
    %607 = vmatpush1.msra.mxu0 0.0
    %608 = vmatprep.subr.mxu0 0.0
    %609 = vmatpush1.msra.mxu0 0.0
    %610 = vmatprep.subr.mxu0 0.0
    %611 = vmatpush1.msra.mxu0 0.0
    %612 = vmatprep.subr.mxu0 0.0
    %613 = vmatpush1.msra.mxu0 0.0
    %614 = vmatprep.subr.mxu0 0.0
    %615 = vmatpush1.msra.mxu0 0.0
    %616 = vmatprep.subr.mxu0 0.0
    %617 = vmatpush1.msra.mxu0 0.0
    %618 = vmatprep.subr.mxu0 0.0
    %619 = vmatpush1.msra.mxu0 0.0
    %620 = vmatprep.subr.mxu0 0.0
    %621 = vmatpush1.msra.mxu0 0.0
    %622 = vmatprep.mubr.f32.mxu0 0.0
    %623 = vmatmul.mubr.f32.gmra.mrb[0].mxu0 %v552
    %v624 = vpop.f32.mrb[0].mxu0
    %v625 = vadd.f32 0.0, %v624
    %v626 = vpop.f32.mrb[0].mxu0
    %627 = vdwg.mxu0
    %v628 = vld [vmem:[%s12] sm:$0xff]
    %v629 = vld [vmem:[%s12 + $0x8] sm:$0xff]
    %v630 = vld [vmem:[%s12 + $0x10] sm:$0xff]
    %v631 = vld [vmem:[%s12 + $0x18] sm:$0xff]
    %v632 = vld [vmem:[#allocation2] sm:$0x1]
    %v633 = vmul.f32 %v632, 30.0
    %v635 = vsel %vm157, %v625, 0
    %637 = vmatprep.subr.mxu0 0.0
    %638 = vmatpush1.msra.mxu0 %v628
    %639 = vmatprep.subr.mxu0 0.0
    %640 = vmatpush1.msra.mxu0 %v629
    %641 = vmatprep.subr.mxu0 0.0
    %642 = vmatpush1.msra.mxu0 %v630
    %643 = vmatprep.subr.mxu0 0.0
    %644 = vmatpush1.msra.mxu0 %v631
    %645 = vmatprep.subr.mxu0 0.0
    %646 = vmatpush1.msra.mxu0 0.0
    %647 = vmatprep.subr.mxu0 0.0
    %648 = vmatpush1.msra.mxu0 0.0
    %649 = vmatprep.subr.mxu0 0.0
    %650 = vmatpush1.msra.mxu0 0.0
    %651 = vmatprep.subr.mxu0 0.0
    %652 = vmatpush1.msra.mxu0 0.0
    %653 = vmatprep.subr.mxu0 0.0
    %654 = vmatpush1.msra.mxu0 0.0
    %655 = vmatprep.subr.mxu0 0.0
    %656 = vmatpush1.msra.mxu0 0.0
    %657 = vmatprep.subr.mxu0 0.0
    %658 = vmatpush1.msra.mxu0 0.0
    %659 = vmatprep.subr.mxu0 0.0
    %660 = vmatpush1.msra.mxu0 0.0
    %661 = vmatprep.subr.mxu0 0.0
    %662 = vmatpush1.msra.mxu0 0.0
    %663 = vmatprep.subr.mxu0 0.0
    %664 = vmatpush1.msra.mxu0 0.0
    %665 = vmatprep.subr.mxu0 0.0
    %666 = vmatpush1.msra.mxu0 0.0
    %667 = vmatprep.subr.mxu0 0.0
    %668 = vmatpush1.msra.mxu0 0.0
    %669 = vmatprep.subr.mxu0 0.0
    %670 = vmatpush1.msra.mxu0 0.0
    %671 = vmatprep.subr.mxu0 0.0
    %672 = vmatpush1.msra.mxu0 0.0
    %673 = vmatprep.subr.mxu0 0.0
    %674 = vmatpush1.msra.mxu0 0.0
    %675 = vmatprep.subr.mxu0 0.0
    %676 = vmatpush1.msra.mxu0 0.0
    %677 = vmatprep.subr.mxu0 0.0
    %678 = vmatpush1.msra.mxu0 0.0
    %679 = vmatprep.subr.mxu0 0.0
    %680 = vmatpush1.msra.mxu0 0.0
    %681 = vmatprep.subr.mxu0 0.0
    %682 = vmatpush1.msra.mxu0 0.0
    %683 = vmatprep.subr.mxu0 0.0
    %684 = vmatpush1.msra.mxu0 0.0
    %685 = vmatprep.subr.mxu0 0.0
    %686 = vmatpush1.msra.mxu0 0.0
    %687 = vmatprep.subr.mxu0 0.0
    %688 = vmatpush1.msra.mxu0 0.0
    %689 = vmatprep.subr.mxu0 0.0
    %690 = vmatpush1.msra.mxu0 0.0
    %691 = vmatprep.subr.mxu0 0.0
    %692 = vmatpush1.msra.mxu0 0.0
    %693 = vmatprep.subr.mxu0 0.0
    %694 = vmatpush1.msra.mxu0 0.0
    %695 = vmatprep.subr.mxu0 0.0
    %696 = vmatpush1.msra.mxu0 0.0
    %697 = vmatprep.subr.mxu0 0.0
    %698 = vmatpush1.msra.mxu0 0.0
    %699 = vmatprep.subr.mxu0 0.0
    %700 = vmatpush1.msra.mxu0 0.0
    %701 = vmatprep.mubr.f32.mxu0 0.0
    %702 = vmatmul.mubr.f32.gmra.mrb[0].mxu0 %v635
    %v703 = vpop.f32.mrb[0].mxu0
    %v704 = vadd.f32 %v633, %v703
    %v705 = vpop.f32.mrb[0].mxu0
    %706 = vdwg.mxu0
    %v707 = vld [vmem:[%s3] sm:$0xff]
    %v708 = vld [vmem:[%s3 + $0x8] sm:$0xff]
    %v709 = vld [vmem:[%s3 + $0x10] sm:$0xff]
    %v710 = vld [vmem:[%s3 + $0x18] sm:$0x3f]
    %v711 = vmul.f32 %v707, %v707
    %v712 = vmul.f32 %v708, %v708
    %v713 = vmul.f32 %v709, %v709
    %v714 = vmul.f32 %v710, %v710
    %vm715 = vcmask 23552
    %v716 = vsel %vm715, %v711, 0.0
    %717 = vadd.xlane.f32.xlu0 %v716
    %v718 = vpop.xlane.xlu0 %717
    %v719 = vsel %vm715, %v712, 0.0
    %720 = vadd.xlane.f32.xlu0 %v719
    %v721 = vpop.xlane.xlu0 %720
    %v722 = vsel %vm715, %v713, 0.0
    %723 = vadd.xlane.f32.xlu0 %v722
    %v724 = vpop.xlane.xlu0 %723
    %vm725 = vcmask 21504
    %v726 = vsel %vm725, %v714, 0.0
    %727 = vadd.xlane.f32.xlu0 %v726
    %v728 = vpop.xlane.xlu0 %727
    %v729 = vrsqrt.pop %v718
    %v730 = vmul.f32 %v718, %v729
    %vm731 = vcmp.eq.f32.partialorder %v718, inf
    %v732 = vsel %vm731, %v718, %v730
    %vm733 = vcmp.eq.f32.partialorder %v718, 0.0
    %v734 = vand.u32 %v718, 2147483648
    %v735 = vsel %vm733, %v734, %v732
    %v736 = vrsqrt.pop %v721
    %v737 = vmul.f32 %v721, %v736
    %vm738 = vcmp.eq.f32.partialorder %v721, inf
    %v739 = vsel %vm738, %v721, %v737
    %vm740 = vcmp.eq.f32.partialorder %v721, 0.0
    %v741 = vand.u32 %v721, 2147483648
    %v742 = vsel %vm740, %v741, %v739
    %v743 = vrsqrt.pop %v724
    %v744 = vmul.f32 %v724, %v743
    %vm745 = vcmp.eq.f32.partialorder %v724, inf
    %v746 = vsel %vm745, %v724, %v744
    %vm747 = vcmp.eq.f32.partialorder %v724, 0.0
    %v748 = vand.u32 %v724, 2147483648
    %v749 = vsel %vm747, %v748, %v746
    %v750 = vrsqrt.pop %v728
    %v751 = vmul.f32 %v728, %v750
    %vm752 = vcmp.eq.f32.partialorder %v728, inf
    %v753 = vsel %vm752, %v728, %v751
    %vm754 = vcmp.eq.f32.partialorder %v728, 0.0
    %v755 = vand.u32 %v728, 2147483648
    %v756 = vsel %vm754, %v755, %v753
    %v757 = vsub.f32 %v735, 1.5
    %v758 = vsub.f32 %v742, 1.5
    %v759 = vsub.f32 %v749, 1.5
    %v760 = vsub.f32 %v756, 1.5
    %v761 = vmul.f32 %v757, %v757
    %v762 = vmul.f32 %v758, %v758
    %v763 = vmul.f32 %v759, %v759
    %v764 = vmul.f32 %v760, %v760
    %v765 = vmul.f32 %v761, 1000.0
    %v766 = vmul.f32 %v762, 1000.0
    %v767 = vmul.f32 %v763, 1000.0
    %v768 = vmul.f32 %v764, 1000.0
    %vm769 = vcmask 7168
    %v770 = vsel %vm769, %v765, 0.0
    %v771 = vsel %vm769, %v766, 0.0
    %v772 = vadd.f32 %v770, %v771
    %v773 = vsel %vm769, %v767, 0.0
    %v774 = vadd.f32 %v772, %v773
    %vm775 = vcmask 5120
    %v776 = vsel %vm775, %v768, 0.0
    %v777 = vadd.f32 %v774, %v776
    %778 = vadd.xlane.f32.xlu0 %v777
    %v779 = vpop.xlane.xlu0 %778
    %v780 = vrot.slane %v779, 4
    %v781 = vadd.f32 %v779, %v780
    %v782 = vrot.slane %v781, 2
    %v783 = vadd.f32 %v781, %v782
    %v784 = vrot.slane %v783, 1
    %v785 = vadd.f32 %v783, %v784
    %s786 = vtos %v785
    %v787 = vadd.f32 %v704, 0.0
    %s788 = vtos %v787
    %s789 = sadd.f32 %s788, %s786
    %v790 = vld [vmem:[%s14] sm:$0xf]
    %v791 = vld [vmem:[%s14 + $0x4] sm:$0xf]
    %v792 = vld [vmem:[%s14 + $0x8] sm:$0xf]
    %v793 = vld [vmem:[%s14 + $0xc] sm:$0xf]
    %v794 = vld [vmem:[%s14 + $0x10] sm:$0xf]
    %v795 = vld [vmem:[%s14 + $0x14] sm:$0xf]
    %v796 = vld [vmem:[%s14 + $0x18] sm:$0xf]
    %v797 = vld [vmem:[%s14 + $0x1c] sm:$0xf]
    %v798 = vld [vmem:[%s15] sm:$0x1]
    %v800 = vlaneseq
    %v801 = vshrl.u32 %v800, 7
    %v802 = vsub.s32 0, %v801
    %v803 = vrot.slane %v798, %v802
    %v813 = vunpack.c.l.b16 %v790
    %v814 = vunpack.c.l.b16 %v791
    %v815 = vunpack.c.l.b16 %v792
    %v816 = vunpack.c.l.b16 %v793
    %v817 = vunpack.c.l.b16 %v794
    %v818 = vunpack.c.l.b16 %v795
    %v819 = vunpack.c.l.b16 %v796
    %v820 = vunpack.c.l.b16 %v797
    %v821 = vpack.c.b16 %v814, %v813
    %v822 = vpack.c.b16 %v816, %v815
    %v823 = vpack.c.b16 %v818, %v817
    %v824 = vpack.c.b16 %v820, %v819
    %829 = vmatprep.subr.bf16.mxu0 0
    %830 = vmatpush1.bf16.msra.mxu0 %v821
    %831 = vmatprep.subr.bf16.mxu0 0
    %832 = vmatpush1.bf16.msra.mxu0 %v822
    %833 = vmatprep.subr.bf16.mxu0 0
    %834 = vmatpush1.bf16.msra.mxu0 %v823
    %835 = vmatprep.subr.bf16.mxu0 0
    %836 = vmatpush1.bf16.msra.mxu0 %v824
    %837 = vmatprep.subr.bf16.mxu0 0
    %838 = vmatpush1.bf16.msra.mxu0 0
    %839 = vmatprep.subr.bf16.mxu0 0
    %840 = vmatpush1.bf16.msra.mxu0 0
    %841 = vmatprep.subr.bf16.mxu0 0
    %842 = vmatpush1.bf16.msra.mxu0 0
    %843 = vmatprep.subr.bf16.mxu0 0
    %844 = vmatpush1.bf16.msra.mxu0 0
    %845 = vmatprep.subr.bf16.mxu0 0
    %846 = vmatpush1.bf16.msra.mxu0 0
    %847 = vmatprep.subr.bf16.mxu0 0
    %848 = vmatpush1.bf16.msra.mxu0 0
    %849 = vmatprep.subr.bf16.mxu0 0
    %850 = vmatpush1.bf16.msra.mxu0 0
    %851 = vmatprep.subr.bf16.mxu0 0
    %852 = vmatpush1.bf16.msra.mxu0 0
    %853 = vmatprep.subr.bf16.mxu0 0
    %854 = vmatpush1.bf16.msra.mxu0 0
    %855 = vmatprep.subr.bf16.mxu0 0
    %856 = vmatpush1.bf16.msra.mxu0 0
    %857 = vmatprep.subr.bf16.mxu0 0
    %858 = vmatpush1.bf16.msra.mxu0 0
    %859 = vmatprep.subr.bf16.mxu0 0
    %860 = vmatpush1.bf16.msra.mxu0 0
    %861 = vmatprep.mubr.bf16.mxu0 0
    %862 = vmatmul.mubr.bf16.gmra.mrb[0].mxu0 %v424
    %v863 = vpop.f32.mrb[0].mxu0
    %v864 = vadd.f32 %v803, %v863
    %v865 = vpop.f32.mrb[0].mxu0
    %v866 = vpop.f32.mrb[0].mxu0
    %v867 = vadd.f32 %v803, %v866
    %v868 = vpop.f32.mrb[0].mxu0
    %869 = vdwg.mxu0
    %v870 = vmax.f32 %v864, 0.0
    %v871 = vmax.f32 %v867, 0.0
    %v872 = vpack.c.bf16 %v871, %v870
    %v873 = vld [vmem:[%s16] sm:$0xf]
    %v874 = vld [vmem:[%s16 + $0x4] sm:$0xf]
    %v875 = vld [vmem:[%s16 + $0x8] sm:$0xf]
    %v876 = vld [vmem:[%s16 + $0xc] sm:$0xf]
    %v877 = vld [vmem:[%s16 + $0x10] sm:$0xf]
    %v878 = vld [vmem:[%s16 + $0x14] sm:$0xf]
    %v879 = vld [vmem:[%s16 + $0x18] sm:$0xf]
    %v880 = vld [vmem:[%s16 + $0x1c] sm:$0xf]
    %v881 = vld [vmem:[%s17] sm:$0x1]
    %v883 = vlaneseq
    %v884 = vshrl.u32 %v883, 7
    %v885 = vsub.s32 0, %v884
    %v886 = vrot.slane %v881, %v885
    %v896 = vunpack.c.l.b16 %v873
    %v897 = vunpack.c.l.b16 %v874
    %v898 = vunpack.c.l.b16 %v875
    %v899 = vunpack.c.l.b16 %v876
    %v900 = vunpack.c.l.b16 %v877
    %v901 = vunpack.c.l.b16 %v878
    %v902 = vunpack.c.l.b16 %v879
    %v903 = vunpack.c.l.b16 %v880
    %v904 = vpack.c.b16 %v897, %v896
    %v905 = vpack.c.b16 %v899, %v898
    %v906 = vpack.c.b16 %v901, %v900
    %v907 = vpack.c.b16 %v903, %v902
    %v913 = vsel %vm294, %v872, 0
    %915 = vmatprep.subr.bf16.mxu0 0
    %916 = vmatpush1.bf16.msra.mxu0 %v904
    %917 = vmatprep.subr.bf16.mxu0 0
    %918 = vmatpush1.bf16.msra.mxu0 %v905
    %919 = vmatprep.subr.bf16.mxu0 0
    %920 = vmatpush1.bf16.msra.mxu0 %v906
    %921 = vmatprep.subr.bf16.mxu0 0
    %922 = vmatpush1.bf16.msra.mxu0 %v907
    %923 = vmatprep.subr.bf16.mxu0 0
    %924 = vmatpush1.bf16.msra.mxu0 0
    %925 = vmatprep.subr.bf16.mxu0 0
    %926 = vmatpush1.bf16.msra.mxu0 0
    %927 = vmatprep.subr.bf16.mxu0 0
    %928 = vmatpush1.bf16.msra.mxu0 0
    %929 = vmatprep.subr.bf16.mxu0 0
    %930 = vmatpush1.bf16.msra.mxu0 0
    %931 = vmatprep.subr.bf16.mxu0 0
    %932 = vmatpush1.bf16.msra.mxu0 0
    %933 = vmatprep.subr.bf16.mxu0 0
    %934 = vmatpush1.bf16.msra.mxu0 0
    %935 = vmatprep.subr.bf16.mxu0 0
    %936 = vmatpush1.bf16.msra.mxu0 0
    %937 = vmatprep.subr.bf16.mxu0 0
    %938 = vmatpush1.bf16.msra.mxu0 0
    %939 = vmatprep.subr.bf16.mxu0 0
    %940 = vmatpush1.bf16.msra.mxu0 0
    %941 = vmatprep.subr.bf16.mxu0 0
    %942 = vmatpush1.bf16.msra.mxu0 0
    %943 = vmatprep.subr.bf16.mxu0 0
    %944 = vmatpush1.bf16.msra.mxu0 0
    %945 = vmatprep.subr.bf16.mxu0 0
    %946 = vmatpush1.bf16.msra.mxu0 0
    %947 = vmatprep.mubr.bf16.mxu0 0
    %948 = vmatmul.mubr.bf16.gmra.mrb[0].mxu0 %v913
    %v949 = vpop.f32.mrb[0].mxu0
    %v950 = vadd.f32 %v886, %v949
    %v951 = vpop.f32.mrb[0].mxu0
    %v952 = vpop.f32.mrb[0].mxu0
    %v953 = vadd.f32 %v886, %v952
    %v954 = vpop.f32.mrb[0].mxu0
    %955 = vdwg.mxu0
    %v956 = vmax.f32 %v950, 0.0
    %v957 = vmax.f32 %v953, 0.0
    %v958 = vld [vmem:[%s18] sm:$0xff]
    %v959 = vld [vmem:[%s18 + $0x8] sm:$0xff]
    %v960 = vld [vmem:[%s18 + $0x10] sm:$0xff]
    %v961 = vld [vmem:[%s18 + $0x18] sm:$0xff]
    %v962 = vld [vmem:[%s19] sm:$0x1]
    %v964 = vlaneseq
    %v965 = vshrl.u32 %v964, 7
    %v966 = vsub.s32 0, %v965
    %v967 = vrot.slane %v962, %v966
    %v970 = vsel %vm157, %v956, 0
    %v973 = vsel %vm157, %v957, 0
    %975 = vmatprep.subr.mxu0 0.0
    %976 = vmatpush1.msra.mxu0 %v958
    %977 = vmatprep.subr.mxu0 0.0
    %978 = vmatpush1.msra.mxu0 %v959
    %979 = vmatprep.subr.mxu0 0.0
    %980 = vmatpush1.msra.mxu0 %v960
    %981 = vmatprep.subr.mxu0 0.0
    %982 = vmatpush1.msra.mxu0 %v961
    %983 = vmatprep.subr.mxu0 0.0
    %984 = vmatpush1.msra.mxu0 0.0
    %985 = vmatprep.subr.mxu0 0.0
    %986 = vmatpush1.msra.mxu0 0.0
    %987 = vmatprep.subr.mxu0 0.0
    %988 = vmatpush1.msra.mxu0 0.0
    %989 = vmatprep.subr.mxu0 0.0
    %990 = vmatpush1.msra.mxu0 0.0
    %991 = vmatprep.subr.mxu0 0.0
    %992 = vmatpush1.msra.mxu0 0.0
    %993 = vmatprep.subr.mxu0 0.0
    %994 = vmatpush1.msra.mxu0 0.0
    %995 = vmatprep.subr.mxu0 0.0
    %996 = vmatpush1.msra.mxu0 0.0
    %997 = vmatprep.subr.mxu0 0.0
    %998 = vmatpush1.msra.mxu0 0.0
    %999 = vmatprep.subr.mxu0 0.0
    %1000 = vmatpush1.msra.mxu0 0.0
    %1001 = vmatprep.subr.mxu0 0.0
    %1002 = vmatpush1.msra.mxu0 0.0
    %1003 = vmatprep.subr.mxu0 0.0
    %1004 = vmatpush1.msra.mxu0 0.0
    %1005 = vmatprep.subr.mxu0 0.0
    %1006 = vmatpush1.msra.mxu0 0.0
    %1007 = vmatprep.subr.mxu0 0.0
    %1008 = vmatpush1.msra.mxu0 0.0
    %1009 = vmatprep.subr.mxu0 0.0
    %1010 = vmatpush1.msra.mxu0 0.0
    %1011 = vmatprep.subr.mxu0 0.0
    %1012 = vmatpush1.msra.mxu0 0.0
    %1013 = vmatprep.subr.mxu0 0.0
    %1014 = vmatpush1.msra.mxu0 0.0
    %1015 = vmatprep.subr.mxu0 0.0
    %1016 = vmatpush1.msra.mxu0 0.0
    %1017 = vmatprep.subr.mxu0 0.0
    %1018 = vmatpush1.msra.mxu0 0.0
    %1019 = vmatprep.subr.mxu0 0.0
    %1020 = vmatpush1.msra.mxu0 0.0
    %1021 = vmatprep.subr.mxu0 0.0
    %1022 = vmatpush1.msra.mxu0 0.0
    %1023 = vmatprep.subr.mxu0 0.0
    %1024 = vmatpush1.msra.mxu0 0.0
    %1025 = vmatprep.subr.mxu0 0.0
    %1026 = vmatpush1.msra.mxu0 0.0
    %1027 = vmatprep.subr.mxu0 0.0
    %1028 = vmatpush1.msra.mxu0 0.0
    %1029 = vmatprep.subr.mxu0 0.0
    %1030 = vmatpush1.msra.mxu0 0.0
    %1031 = vmatprep.subr.mxu0 0.0
    %1032 = vmatpush1.msra.mxu0 0.0
    %1033 = vmatprep.subr.mxu0 0.0
    %1034 = vmatpush1.msra.mxu0 0.0
    %1035 = vmatprep.subr.mxu0 0.0
    %1036 = vmatpush1.msra.mxu0 0.0
    %1037 = vmatprep.subr.mxu0 0.0
    %1038 = vmatpush1.msra.mxu0 0.0
    %1039 = vmatprep.mubr.f32.mxu0 0.0
    %1040 = vmatmul.mubr.f32.gmra.mrb[0].mxu0 %v970
    %v1041 = vpop.f32.mrb[0].mxu0
    %v1042 = vadd.f32 %v967, %v1041
    %v1043 = vpop.f32.mrb[0].mxu0
    %1044 = vmatprep.mubr.f32.mxu0 0.0
    %1045 = vmatmul.mubr.f32.gmra.mrb[0].mxu0 %v973
    %v1046 = vpop.f32.mrb[0].mxu0
    %v1047 = vadd.f32 %v967, %v1046
    %v1048 = vpop.f32.mrb[0].mxu0
    %1049 = vdwg.mxu0
    %v1050 = vxor.u32 %v1042, 2147483648
    %v1051 = vxor.u32 %v1047, 2147483648
    %v1052 = vmul.f32 %v1050, 1.442695
    %v1053 = vpow.pop %v1052
    %v1054 = vmul.f32 %v1051, 1.442695
    %v1055 = vpow.pop %v1054
    %v1056 = vadd.f32 %v1053, 1.0
    %v1057 = vadd.f32 %v1055, 1.0
    %v1058 = vrcp.pop %v1056
    %v1059 = vmul.f32 1.0, %v1058
    %v1060 = vrcp.pop %v1057
    %v1061 = vmul.f32 1.0, %v1060
    %vm1062 = vcmask 15360
    %v1063 = vsel %vm1062, %v1059, 0.0
    %v1064 = vsel %vm1062, %v1061, 0.0
    %v1065 = vadd.f32 %v1063, %v1064
    %1066 = vadd.xlane.f32.xlu0 %v1065
    %v1067 = vpop.xlane.xlu0 %1066
    %v1068 = vrot.slane %v1067, 4
    %v1069 = vadd.f32 %v1067, %v1068
    %v1070 = vrot.slane %v1069, 2
    %v1071 = vadd.f32 %v1069, %v1070
    %v1072 = vrot.slane %v1071, 1
    %v1073 = vadd.f32 %v1071, %v1072
    %s1074 = vtos %v1073
    %v1075 = vrcp.pop 32.0
    %s1076 = vtos %v1075
    %s1077 = smul.f32 %s1074, %s1076
    %s1078 = sadd.f32 %s789, 3.0
    %p1079 = scmp.lt.f32.partialorder %s1077, 0.5
    %s1080 = ssub.f32 1.0, %s1077
    %s1081 = smul.f32 %s1080, 10.0
    %s1082 = scalar_select %p1079, %s1081, 0.0
    %s1083 = sadd.f32 %s1078, %s1082
    %v1084 = vlaneseq
    %v1085 = vand.u32 %v1084, 127
    %vm1086 = vcmp.eq.s32.totalorder %v1085, 0
    %vm1087 = vcmp.eq.s32.totalorder %v1085, 1
    %vm1088 = vcmp.eq.s32.totalorder %v1085, 2
    %v1089 = vstv %s1083
    %v1090 = vsel %vm1088, %v1089, 0.0
    %v1091 = vstv %s1077
    %v1092 = vsel %vm1087, %v1091, %v1090
    %v1093 = vstv %s789
    %v1094 = vsel %vm1086, %v1093, %v1092
    %1095 = vst [vmem:[#allocation3] sm:$0x1] %v1094
    // Predicated region
    $region82: #{tpu_custom_call.1} parent=1 // pred_check
      _
    $region83: #{tpu_custom_call.1} parent=1 // pred_check_branch
      %1097 = sbr.rel (0) target = $region85
    $region84: #{tpu_custom_call.1} parent=1 // pred_region
      %s1099 = ssub.s32 16, 16
      %1100 = vsyncadd [#allocation4], %s1099
      %s1102 = sshll.u32 [#allocation3], 4
      %s1103 = int_to_ptr.vmem [resolvable:$true] %s1102
      %1105 = dma.vmem_to_hbm [thread:$0]  %s1103, 16, %s20, [#allocation4]
    $region85: #{tpu_custom_call.1} parent=1 // pred_fallthru
      _
    // Predicated region
    $region86: #{tpu_custom_call.1} parent=1 // pred_check
      _
    $region87: #{tpu_custom_call.1} parent=1 // pred_check_branch
      %1107 = sbr.rel (0) target = $region89
    $region88: #{tpu_custom_call.1} parent=1 // pred_region
      %1108 = dma.done [#allocation4], 16
    $region89: #{tpu_custom_call.1} parent=1 // pred_fallthru
      _
    %1109 = vsyncpa [#allocation4], 1

</llo_original>
